<compile_context>
chip_gen: v7x
topology: tpu7x:2x2x1
jax: 0.10.0
libtpu: 0.0.40
codegen_flags: <defaults>
</compile_context>

<pallas_src>
import jax
import jax.numpy as jnp
from jax.experimental import pallas as pl
from jax.experimental.pallas import tpu as pltpu

HID = 64  # hidden width of every Linear in the module


def _round_up(x, m):
    return ((x + m - 1) // m) * m


def actor_critic_kernel(obs_ref, w1_ref, w2_ref, wh_ref, wo_ref, bias_ref, out_ref):
    pad = out_ref.shape[-1]
    cd = w1_ref.dtype                      # compute dtype (f32 or bf16)
    x = obs_ref[...].astype(cd)            # [tile_b, S]

    # Each bias segment lives on its own row, starting at lane 0 (no rotates).
    b1 = bias_ref[0:1, :HID]               # [1, 64]
    b2 = bias_ref[1:2, :HID]               # [1, 64]
    bh = bias_ref[2:3, :2 * HID]           # [1, 128]
    bo = bias_ref[3:4, :pad]               # [1, PAD]

    # shared_layers: Linear -> ReLU -> Linear -> ReLU  (f32 accumulation)
    z = jnp.maximum(
        jnp.dot(x, w1_ref[...], preferred_element_type=jnp.float32) + b1, 0.0)
    z = jnp.maximum(
        jnp.dot(z.astype(cd), w2_ref[...], preferred_element_type=jnp.float32) + b2,
        0.0)

    # fused head first layers: z @ [wp1 | wv1] -> single 128-lane-wide result
    h = jnp.maximum(
        jnp.dot(z.astype(cd), wh_ref[...], preferred_element_type=jnp.float32) + bh,
        0.0)

    # fused head second layers: block-diagonal [wp2 ; wv2], only PAD lanes wide
    # -> small [tile_b, PAD] HBM writeback (logits | value | tiny pad).
    out_ref[...] = (
        jnp.dot(h.astype(cd), wo_ref[...], preferred_element_type=jnp.float32) + bo
    ).astype(out_ref.dtype)


def pack_params(params, *, compute_dtype=jnp.float32):
    """One-time host-side packing of the 12 Linear params into 5 buffers."""
    A = params["wp2"].shape[1]
    PAD = _round_up(A + 1, 8)              # packed output width: logits|value|pad
    assert A + 1 <= PAD
    BW = max(2 * HID, _round_up(PAD, 128))  # bias slab lane width

    # Head first-layer weights fused side by side.
    wh = jnp.concatenate([params["wp1"], params["wv1"]], axis=1)        # [64, 128]

    # Head second-layer weights fused block-diagonally, only PAD lanes wide.
    wo = jnp.zeros((2 * HID, PAD), jnp.float32)
    wo = wo.at[:HID, :A].set(params["wp2"])                             # policy blk
    wo = wo.at[HID:, A:A + 1].set(params["wv2"])                        # value blk

    # Biases: one [4, BW] slab, each segment starting at lane 0 of its row.
    def _row(b):
        return jnp.pad(b, ((0, 0), (0, BW - b.shape[1])))

    bh = jnp.concatenate([params["bp1"], params["bv1"]], axis=1)        # [1, 128]
    bo = jnp.zeros((1, PAD), jnp.float32)
    bo = bo.at[:, :A].set(params["bp2"])
    bo = bo.at[:, A:A + 1].set(params["bv2"])
    bias = jnp.concatenate(
        [_row(params["b1"]), _row(params["b2"]), _row(bh), _row(bo)], axis=0)

    cd = compute_dtype
    return dict(
        w1=params["w1"].astype(cd), w2=params["w2"].astype(cd),
        wh=wh.astype(cd), wo=wo.astype(cd),
        bias=bias.astype(jnp.float32),              # biases always f32
        action_size=A, out_pad=PAD, bias_width=BW)


def actor_critic_forward(obs, packed, *, tile_b=8192):
    """obs: [B, state_size] f32. Returns (policy_logits [B, A], value [B, 1])."""
    B, S = obs.shape
    A = packed["action_size"]
    PAD = packed["out_pad"]
    BW = packed["bias_width"]

    # Batch tiling: sublane-aligned, VMEM-capped, and (for large batches) split
    # into >= 2 grid steps so the "parallel" axis uses both v7x TensorCores.
    tile_b = _round_up(max(int(tile_b), 8), 8)
    tile_b = min(tile_b, _round_up(B, 8))
    tile_b = min(tile_b, 16384)                      # ~34 MiB of buffered blocks
    if B >= 1024:
        tile_b = min(tile_b, _round_up((B + 1) // 2, 8))
    Bp = _round_up(B, tile_b)
    if Bp != B:
        obs = jnp.pad(obs, ((0, Bp - B), (0, 0)))
    grid = (Bp // tile_b,)

    const = lambda i: (0, 0)   # weights/biases stay VMEM-resident across steps

    # VMEM: double-buffered obs + out blocks, both lane-padded to 128 lanes.
    vmem_limit = 4 * tile_b * 128 * 4 + (2 << 20)

    # Advisory cost hint for XLA scheduling around this small custom call.
    layer_macs = S * HID + HID * HID + HID * 2 * HID + 2 * HID * PAD
    weight_bytes = layer_macs * jnp.dtype(packed["w1"].dtype).itemsize + 4 * BW * 4
    cost = pl.CostEstimate(
        flops=2 * Bp * layer_macs,
        transcendentals=0,
        bytes_accessed=int(Bp * (S + PAD) * 4 + weight_bytes))

    out = pl.pallas_call(
        actor_critic_kernel,
        out_shape=jax.ShapeDtypeStruct((Bp, PAD), jnp.float32),
        grid=grid,
        in_specs=[
            pl.BlockSpec((tile_b, S), lambda i: (i, 0)),       # obs (batch tiled)
            pl.BlockSpec((S, HID), const),                     # w1
            pl.BlockSpec((HID, HID), const),                   # w2
            pl.BlockSpec((HID, 2 * HID), const),               # fused head-1 weights
            pl.BlockSpec((2 * HID, PAD), const),               # fused head-2 weights
            pl.BlockSpec((4, BW), const),                      # packed biases
        ],
        out_specs=pl.BlockSpec((tile_b, PAD), lambda i: (i, 0)),
        compiler_params=pltpu.CompilerParams(
            dimension_semantics=("parallel",),
            vmem_limit_bytes=int(vmem_limit)),
        cost_estimate=cost,
    )(obs, packed["w1"], packed["w2"], packed["wh"], packed["wo"], packed["bias"])

    logits = out[:B, :A]
    value = out[:B, A:A + 1]
    return logits, value


def init_params(key, state_size, action_size):
    """Deterministic init matching PyTorch Linear default: U(-1/sqrt(in), 1/sqrt(in))."""
    def linear(key, fan_in, fan_out):
        kw, kb = jax.random.split(key)
        bound = 1.0 / jnp.sqrt(jnp.float32(fan_in))
        w = jax.random.uniform(kw, (fan_in, fan_out), jnp.float32, -bound, bound)
        b = jax.random.uniform(kb, (1, fan_out), jnp.float32, -bound, bound)
        return w, b

    keys = jax.random.split(key, 6)
    w1, b1 = linear(keys[0], state_size, HID)
    w2, b2 = linear(keys[1], HID, HID)
    wp1, bp1 = linear(keys[2], HID, HID)
    wp2, bp2 = linear(keys[3], HID, action_size)
    wv1, bv1 = linear(keys[4], HID, 1 * HID)
    wv2, bv2 = linear(keys[5], HID, 1)
    return dict(w1=w1, b1=b1, w2=w2, b2=b2,
                wp1=wp1, bp1=bp1, wp2=wp2, bp2=bp2,
                wv1=wv1, bv1=bv1, wv2=wv2, bv2=bv2)


def reference_forward(obs, p):
    """Pure-JAX reference mirroring the PyTorch forward."""
    z = jnp.maximum(obs @ p["w1"] + p["b1"], 0.0)
    z = jnp.maximum(z @ p["w2"] + p["b2"], 0.0)
    logits = jnp.maximum(z @ p["wp1"] + p["bp1"], 0.0) @ p["wp2"] + p["bp2"]
    value = jnp.maximum(z @ p["wv1"] + p["bv1"], 0.0) @ p["wv2"] + p["bv2"]
    return logits, value


if __name__ == "__main__":
    state_size = 4     # CartPole observation dim
    action_size = 2    # CartPole action dim
    batch = 8

    key = jax.random.PRNGKey(0)
    k_obs, k_params, k_obs2 = jax.random.split(key, 3)
    obs = jax.random.normal(k_obs, (batch, state_size), dtype=jnp.float32)
    params = init_params(k_params, state_size, action_size)
    packed = pack_params(params)

    # Small (single-tile) case, f32 compute.
    logits, value = actor_critic_forward(obs, packed)
    jax.block_until_ready((logits, value))
    ref_logits, ref_value = reference_forward(obs, params)
    assert logits.shape == (batch, action_size)
    assert value.shape == (batch, 1)
    assert jnp.allclose(logits, ref_logits, atol=1e-4, rtol=1e-4)
    assert jnp.allclose(value, ref_value, atol=1e-4, rtol=1e-4)

    # Rollout-sized ragged batch: exercises multi-step grid + padding path.
    obs2 = jax.random.normal(k_obs2, (1000, state_size), dtype=jnp.float32)
    logits2, value2 = actor_critic_forward(obs2, packed, tile_b=256)
    jax.block_until_ready((logits2, value2))
    ref_logits2, ref_value2 = reference_forward(obs2, params)
    assert logits2.shape == (1000, action_size)
    assert value2.shape == (1000, 1)
    assert jnp.allclose(logits2, ref_logits2, atol=1e-4, rtol=1e-4)
    assert jnp.allclose(value2, ref_value2, atol=1e-4, rtol=1e-4)

    # Optional bf16-compute path (MXU-native inputs, f32 accumulation).
    packed_bf16 = pack_params(params, compute_dtype=jnp.bfloat16)
    logits3, value3 = actor_critic_forward(obs2, packed_bf16)
    jax.block_until_ready((logits3, value3))
    assert logits3.shape == (1000, action_size)
    assert value3.shape == (1000, 1)
    assert jnp.allclose(logits3, ref_logits2, atol=5e-2, rtol=5e-2)
    assert jnp.allclose(value3, ref_value2, atol=5e-2, rtol=5e-2)

    print("KERNEL_OK")
</pallas_src>

<mosaic_0001>
module attributes {stable_mosaic.version = 11 : i64} {
  func.func @actor_critic_kernel(%arg0: i32, %arg1: memref<8x4xf32, #tpu.memory_space<vmem>>, %arg2: memref<4x64xf32, #tpu.memory_space<vmem>>, %arg3: memref<64x64xf32, #tpu.memory_space<vmem>>, %arg4: memref<64x128xf32, #tpu.memory_space<vmem>>, %arg5: memref<128x8xf32, #tpu.memory_space<vmem>>, %arg6: memref<4x128xf32, #tpu.memory_space<vmem>>, %arg7: memref<8x8xf32, #tpu.memory_space<vmem>>) attributes {dimension_semantics = [#tpu.dimension_semantics<parallel>], iteration_bounds = array<i64: 1>, scalar_prefetch = 0 : i64, scratch_operands = 0 : i64, tpu.core_type = #tpu.core_type<tc>, window_params = [{transform_indices = @transform_0, window_bounds = array<i64: 8, 4>}, {pipeline_mode = #tpu.pipeline_mode<synchronous>, transform_indices = @transform_1, window_bounds = array<i64: 4, 64>}, {pipeline_mode = #tpu.pipeline_mode<synchronous>, transform_indices = @transform_2, window_bounds = array<i64: 64, 64>}, {pipeline_mode = #tpu.pipeline_mode<synchronous>, transform_indices = @transform_3, window_bounds = array<i64: 64, 128>}, {pipeline_mode = #tpu.pipeline_mode<synchronous>, transform_indices = @transform_4, window_bounds = array<i64: 128, 8>}, {pipeline_mode = #tpu.pipeline_mode<synchronous>, transform_indices = @transform_5, window_bounds = array<i64: 4, 128>}, {transform_indices = @transform_6, window_bounds = array<i64: 8, 8>}]} {
    %c0 = arith.constant 0 : index
    %c0_0 = arith.constant 0 : index
    %0 = vector.load %arg1[%c0, %c0_0] : memref<8x4xf32, #tpu.memory_space<vmem>>, vector<8x4xf32>
    %c0_1 = arith.constant 0 : index
    %c0_2 = arith.constant 0 : index
    %1 = vector.load %arg6[%c0_1, %c0_2] : memref<4x128xf32, #tpu.memory_space<vmem>>, vector<1x64xf32>
    %c1 = arith.constant 1 : index
    %c0_3 = arith.constant 0 : index
    %2 = vector.load %arg6[%c1, %c0_3] : memref<4x128xf32, #tpu.memory_space<vmem>>, vector<1x64xf32>
    %c2 = arith.constant 2 : index
    %c0_4 = arith.constant 0 : index
    %3 = vector.load %arg6[%c2, %c0_4] : memref<4x128xf32, #tpu.memory_space<vmem>>, vector<1x128xf32>
    %c3 = arith.constant 3 : index
    %c0_5 = arith.constant 0 : index
    %4 = vector.load %arg6[%c3, %c0_5] : memref<4x128xf32, #tpu.memory_space<vmem>>, vector<1x8xf32>
    %c0_6 = arith.constant 0 : index
    %c0_7 = arith.constant 0 : index
    %5 = vector.load %arg2[%c0_6, %c0_7] : memref<4x64xf32, #tpu.memory_space<vmem>>, vector<4x64xf32>
    %cst = arith.constant dense<0.000000e+00> : vector<8x64xf32>
    %6 = tpu.matmul %0, %5, %cst {dimension_numbers = #tpu.dot_dimension_numbers<[1], [0], [0], [1], [0, 0, 1, 1], [], []>} : vector<8x4xf32>, vector<4x64xf32>, vector<8x64xf32> -> vector<8x64xf32>
    %7 = vector.broadcast %1 : vector<1x64xf32> to vector<8x64xf32>
    %8 = arith.addf %6, %7 : vector<8x64xf32>
    %cst_8 = arith.constant 0.000000e+00 : f32
    %9 = vector.broadcast %cst_8 : f32 to vector<8x64xf32>
    %10 = arith.maximumf %8, %9 : vector<8x64xf32>
    %c0_9 = arith.constant 0 : index
    %c0_10 = arith.constant 0 : index
    %11 = vector.load %arg3[%c0_9, %c0_10] : memref<64x64xf32, #tpu.memory_space<vmem>>, vector<64x64xf32>
    %cst_11 = arith.constant dense<0.000000e+00> : vector<8x64xf32>
    %12 = tpu.matmul %10, %11, %cst_11 {dimension_numbers = #tpu.dot_dimension_numbers<[1], [0], [0], [1], [0, 0, 1, 1], [], []>} : vector<8x64xf32>, vector<64x64xf32>, vector<8x64xf32> -> vector<8x64xf32>
    %13 = vector.broadcast %2 : vector<1x64xf32> to vector<8x64xf32>
    %14 = arith.addf %12, %13 : vector<8x64xf32>
    %cst_12 = arith.constant 0.000000e+00 : f32
    %15 = vector.broadcast %cst_12 : f32 to vector<8x64xf32>
    %16 = arith.maximumf %14, %15 : vector<8x64xf32>
    %c0_13 = arith.constant 0 : index
    %c0_14 = arith.constant 0 : index
    %17 = vector.load %arg4[%c0_13, %c0_14] : memref<64x128xf32, #tpu.memory_space<vmem>>, vector<64x128xf32>
    %cst_15 = arith.constant dense<0.000000e+00> : vector<8x128xf32>
    %18 = tpu.matmul %16, %17, %cst_15 {dimension_numbers = #tpu.dot_dimension_numbers<[1], [0], [0], [1], [0, 0, 1, 1], [], []>} : vector<8x64xf32>, vector<64x128xf32>, vector<8x128xf32> -> vector<8x128xf32>
    %19 = vector.broadcast %3 : vector<1x128xf32> to vector<8x128xf32>
    %20 = arith.addf %18, %19 : vector<8x128xf32>
    %cst_16 = arith.constant 0.000000e+00 : f32
    %21 = vector.broadcast %cst_16 : f32 to vector<8x128xf32>
    %22 = arith.maximumf %20, %21 : vector<8x128xf32>
    %c0_17 = arith.constant 0 : index
    %c0_18 = arith.constant 0 : index
    %23 = vector.load %arg5[%c0_17, %c0_18] : memref<128x8xf32, #tpu.memory_space<vmem>>, vector<128x8xf32>
    %cst_19 = arith.constant dense<0.000000e+00> : vector<8x8xf32>
    %24 = tpu.matmul %22, %23, %cst_19 {dimension_numbers = #tpu.dot_dimension_numbers<[1], [0], [0], [1], [0, 0, 1, 1], [], []>} : vector<8x128xf32>, vector<128x8xf32>, vector<8x8xf32> -> vector<8x8xf32>
    %25 = vector.broadcast %4 : vector<1x8xf32> to vector<8x8xf32>
    %26 = arith.addf %24, %25 : vector<8x8xf32>
    %c0_20 = arith.constant 0 : index
    %c0_21 = arith.constant 0 : index
    %27 = vector.load %arg7[%c0_20, %c0_21] : memref<8x8xf32, #tpu.memory_space<vmem>>, vector<8x8xf32>
    tpu.vector_store %arg7[%c0_20, %c0_21], %26 {strides = array<i32>} : memref<8x8xf32, #tpu.memory_space<vmem>>, vector<8x8xf32>,
    return
  }
  func.func @transform_0(%arg0: i32) -> (i32, i32) {
    %c0_i32 = arith.constant 0 : i32
    %c0_i32_0 = arith.constant 0 : i32
    return %arg0, %c0_i32 : i32, i32
  }
  func.func @transform_1(%arg0: i32) -> (i32, i32) {
    %c0_i32 = arith.constant 0 : i32
    %c0_i32_0 = arith.constant 0 : i32
    %c0_i32_1 = arith.constant 0 : i32
    return %c0_i32, %c0_i32_0 : i32, i32
  }
  func.func @transform_2(%arg0: i32) -> (i32, i32) {
    %c0_i32 = arith.constant 0 : i32
    %c0_i32_0 = arith.constant 0 : i32
    %c0_i32_1 = arith.constant 0 : i32
    return %c0_i32, %c0_i32_0 : i32, i32
  }
  func.func @transform_3(%arg0: i32) -> (i32, i32) {
    %c0_i32 = arith.constant 0 : i32
    %c0_i32_0 = arith.constant 0 : i32
    %c0_i32_1 = arith.constant 0 : i32
    return %c0_i32, %c0_i32_0 : i32, i32
  }
  func.func @transform_4(%arg0: i32) -> (i32, i32) {
    %c0_i32 = arith.constant 0 : i32
    %c0_i32_0 = arith.constant 0 : i32
    %c0_i32_1 = arith.constant 0 : i32
    return %c0_i32, %c0_i32_0 : i32, i32
  }
  func.func @transform_5(%arg0: i32) -> (i32, i32) {
    %c0_i32 = arith.constant 0 : i32
    %c0_i32_0 = arith.constant 0 : i32
    %c0_i32_1 = arith.constant 0 : i32
    return %c0_i32, %c0_i32_0 : i32, i32
  }
  func.func @transform_6(%arg0: i32) -> (i32, i32) {
    %c0_i32 = arith.constant 0 : i32
    %c0_i32_0 = arith.constant 0 : i32
    return %arg0, %c0_i32 : i32, i32
  }
}

</mosaic_0001>

<llo_original>
// kernel: tpu_custom_call.1
$region0: #{tpu_custom_call.1}
  #allocation0 [shape = 'u32[]', space=smem, size = 0x4, offset = 0x4, fixed_abs, tag = 'smem constant byte address 0x4 - core index']
  #allocation1 [shape = 'u32[144,128]{1,0:T(1,128)}', space=vmem, size = 0x12000, scoped, tag = 'internal scratch']
  %s0 = inlined_call_operand.vmem [shape: f32[8,4], index: 0, kind: input, shape index: {}]
  %s1 = inlined_call_operand.vmem [shape: f32[4,64], index: 1, kind: input, shape index: {}]
  %s2 = inlined_call_operand.vmem [shape: f32[64,64], index: 2, kind: input, shape index: {}]
  %s3 = inlined_call_operand.vmem [shape: f32[64,128], index: 3, kind: input, shape index: {}]
  %s4 = inlined_call_operand.vmem [shape: f32[128,8], index: 4, kind: input, shape index: {}]
  %s5 = inlined_call_operand.vmem [shape: f32[4,128], index: 5, kind: input, shape index: {}]
  %s6 = inlined_call_operand.hbm [shape: f32[8,8], index: 6, kind: output, shape index: {}]
  %s7 = sld [smem:[#allocation0]]
  $region34: #{tpu_custom_call.1} parent=0
    _
  %s9 = ssub.s32 1, %s7
  %s10 = scalar_select 0, %s9, %s7
  $region1: #{tpu_custom_call.1} parent=0
    #allocation2 [shape = 'u8[4096]{0}', space=vmem, size = 0x1000, scoped, tag = 'output window, operand 0, single buffered']
    #allocation3 [shape = 's32[1]{0}', space=sflag, size = 0x4, scoped, tag = 'scoped memory for tpu_custom_call.1']
    %11 = vsyncpa [#allocation3], 0
    // Predicated region
    $region2: #{tpu_custom_call.1} parent=1 // pred_check
      _
    $region3: #{tpu_custom_call.1} parent=1 // pred_check_branch
      %13 = sbr.rel (0) target = $region5
    $region4: #{tpu_custom_call.1} parent=1 // pred_region
      _
    $region5: #{tpu_custom_call.1} parent=1 // pred_fallthru
      _
    // Predicated region
    $region6: #{tpu_custom_call.1} parent=1 // pred_check
      _
    $region7: #{tpu_custom_call.1} parent=1 // pred_check_branch
      %15 = sbr.rel (0) target = $region9
    $region8: #{tpu_custom_call.1} parent=1 // pred_region
      _
    $region9: #{tpu_custom_call.1} parent=1 // pred_fallthru
      _
    // Predicated region
    $region10: #{tpu_custom_call.1} parent=1 // pred_check
      _
    $region11: #{tpu_custom_call.1} parent=1 // pred_check_branch
      %17 = sbr.rel (0) target = $region13
    $region12: #{tpu_custom_call.1} parent=1 // pred_region
      _
    $region13: #{tpu_custom_call.1} parent=1 // pred_fallthru
      _
    // Predicated region
    $region14: #{tpu_custom_call.1} parent=1 // pred_check
      _
    $region15: #{tpu_custom_call.1} parent=1 // pred_check_branch
      %19 = sbr.rel (0) target = $region17
    $region16: #{tpu_custom_call.1} parent=1 // pred_region
      _
    $region17: #{tpu_custom_call.1} parent=1 // pred_fallthru
      _
    // Predicated region
    $region18: #{tpu_custom_call.1} parent=1 // pred_check
      _
    $region19: #{tpu_custom_call.1} parent=1 // pred_check_branch
      %21 = sbr.rel (0) target = $region21
    $region20: #{tpu_custom_call.1} parent=1 // pred_region
      _
    $region21: #{tpu_custom_call.1} parent=1 // pred_fallthru
      _
    // Predicated region
    $region22: #{tpu_custom_call.1} parent=1 // pred_check
      _
    $region23: #{tpu_custom_call.1} parent=1 // pred_check_branch
      %23 = sbr.rel (0) target = $region25
    $region24: #{tpu_custom_call.1} parent=1 // pred_region
      _
    $region25: #{tpu_custom_call.1} parent=1 // pred_fallthru
      _
    %v24 = vld [vmem:[%s0] sm:$0xff]
    %v25 = vld [vmem:[%s5] sm:$0x1]
    %v26 = vld [vmem:[%s5 + $0x1] sm:$0x1]
    %v27 = vld [vmem:[%s5 + $0x2] sm:$0x1]
    %v28 = vld [vmem:[%s5 + $0x3] sm:$0x1]
    %v29 = vld [vmem:[%s1] sm:$0xf]
    %v30 = vlaneseq
    %v31 = vshrl.u32 %v30, 7
    %v32 = vsub.s32 0, %v31
    %v33 = vrot.slane %v25, %v32
    %vm34 = vcmask 31744
    %v36 = vsel %vm34, %v24, 0
    %vm38 = vcmask 1043456
    %v40 = vsel %vm38, %v29, 0
    %42 = vmatprep.subr.mxu0 0.0
    %43 = vmatpush1.msra.mxu0 %v40
    %44 = vmatprep.subr.mxu0 0.0
    %45 = vmatpush1.msra.mxu0 0.0
    %46 = vmatprep.subr.mxu0 0.0
    %47 = vmatpush1.msra.mxu0 0.0
    %48 = vmatprep.subr.mxu0 0.0
    %49 = vmatpush1.msra.mxu0 0.0
    %50 = vmatprep.subr.mxu0 0.0
    %51 = vmatpush1.msra.mxu0 0.0
    %52 = vmatprep.subr.mxu0 0.0
    %53 = vmatpush1.msra.mxu0 0.0
    %54 = vmatprep.subr.mxu0 0.0
    %55 = vmatpush1.msra.mxu0 0.0
    %56 = vmatprep.subr.mxu0 0.0
    %57 = vmatpush1.msra.mxu0 0.0
    %58 = vmatprep.subr.mxu0 0.0
    %59 = vmatpush1.msra.mxu0 0.0
    %60 = vmatprep.subr.mxu0 0.0
    %61 = vmatpush1.msra.mxu0 0.0
    %62 = vmatprep.subr.mxu0 0.0
    %63 = vmatpush1.msra.mxu0 0.0
    %64 = vmatprep.subr.mxu0 0.0
    %65 = vmatpush1.msra.mxu0 0.0
    %66 = vmatprep.subr.mxu0 0.0
    %67 = vmatpush1.msra.mxu0 0.0
    %68 = vmatprep.subr.mxu0 0.0
    %69 = vmatpush1.msra.mxu0 0.0
    %70 = vmatprep.subr.mxu0 0.0
    %71 = vmatpush1.msra.mxu0 0.0
    %72 = vmatprep.subr.mxu0 0.0
    %73 = vmatpush1.msra.mxu0 0.0
    %74 = vmatprep.subr.mxu0 0.0
    %75 = vmatpush1.msra.mxu0 0.0
    %76 = vmatprep.subr.mxu0 0.0
    %77 = vmatpush1.msra.mxu0 0.0
    %78 = vmatprep.subr.mxu0 0.0
    %79 = vmatpush1.msra.mxu0 0.0
    %80 = vmatprep.subr.mxu0 0.0
    %81 = vmatpush1.msra.mxu0 0.0
    %82 = vmatprep.subr.mxu0 0.0
    %83 = vmatpush1.msra.mxu0 0.0
    %84 = vmatprep.subr.mxu0 0.0
    %85 = vmatpush1.msra.mxu0 0.0
    %86 = vmatprep.subr.mxu0 0.0
    %87 = vmatpush1.msra.mxu0 0.0
    %88 = vmatprep.subr.mxu0 0.0
    %89 = vmatpush1.msra.mxu0 0.0
    %90 = vmatprep.subr.mxu0 0.0
    %91 = vmatpush1.msra.mxu0 0.0
    %92 = vmatprep.subr.mxu0 0.0
    %93 = vmatpush1.msra.mxu0 0.0
    %94 = vmatprep.subr.mxu0 0.0
    %95 = vmatpush1.msra.mxu0 0.0
    %96 = vmatprep.subr.mxu0 0.0
    %97 = vmatpush1.msra.mxu0 0.0
    %98 = vmatprep.subr.mxu0 0.0
    %99 = vmatpush1.msra.mxu0 0.0
    %100 = vmatprep.subr.mxu0 0.0
    %101 = vmatpush1.msra.mxu0 0.0
    %102 = vmatprep.subr.mxu0 0.0
    %103 = vmatpush1.msra.mxu0 0.0
    %104 = vmatprep.subr.mxu0 0.0
    %105 = vmatpush1.msra.mxu0 0.0
    %106 = vmatprep.mubr.f32.mxu0 0.0
    %107 = vmatmul.mubr.f32.gmra.mrb[0].mxu0 %v36
    %v108 = vpop.f32.mrb[0].mxu0
    %v109 = vadd.f32 %v33, %v108
    %v110 = vpop.f32.mrb[0].mxu0
    %111 = vdwg.mxu0
    %v112 = vmax.f32 %v109, 0.0
    %v113 = vld [vmem:[%s2] sm:$0xff]
    %v114 = vld [vmem:[%s2 + $0x8] sm:$0xff]
    %v115 = vld [vmem:[%s2 + $0x10] sm:$0xff]
    %v116 = vld [vmem:[%s2 + $0x18] sm:$0xff]
    %v117 = vld [vmem:[%s2 + $0x20] sm:$0xff]
    %v118 = vld [vmem:[%s2 + $0x28] sm:$0xff]
    %v119 = vld [vmem:[%s2 + $0x30] sm:$0xff]
    %v120 = vld [vmem:[%s2 + $0x38] sm:$0xff]
    %v121 = vlaneseq
    %v122 = vshrl.u32 %v121, 7
    %v123 = vsub.s32 0, %v122
    %v124 = vrot.slane %v26, %v123
    %vm125 = vcmask 523264
    %v127 = vsel %vm125, %v112, 0
    %129 = vmatprep.subr.mxu0 0.0
    %130 = vmatpush1.msra.mxu0 %v113
    %131 = vmatprep.subr.mxu0 0.0
    %132 = vmatpush1.msra.mxu0 %v114
    %133 = vmatprep.subr.mxu0 0.0
    %134 = vmatpush1.msra.mxu0 %v115
    %135 = vmatprep.subr.mxu0 0.0
    %136 = vmatpush1.msra.mxu0 %v116
    %137 = vmatprep.subr.mxu0 0.0
    %138 = vmatpush1.msra.mxu0 %v117
    %139 = vmatprep.subr.mxu0 0.0
    %140 = vmatpush1.msra.mxu0 %v118
    %141 = vmatprep.subr.mxu0 0.0
    %142 = vmatpush1.msra.mxu0 %v119
    %143 = vmatprep.subr.mxu0 0.0
    %144 = vmatpush1.msra.mxu0 %v120
    %145 = vmatprep.subr.mxu0 0.0
    %146 = vmatpush1.msra.mxu0 0.0
    %147 = vmatprep.subr.mxu0 0.0
    %148 = vmatpush1.msra.mxu0 0.0
    %149 = vmatprep.subr.mxu0 0.0
    %150 = vmatpush1.msra.mxu0 0.0
    %151 = vmatprep.subr.mxu0 0.0
    %152 = vmatpush1.msra.mxu0 0.0
    %153 = vmatprep.subr.mxu0 0.0
    %154 = vmatpush1.msra.mxu0 0.0
    %155 = vmatprep.subr.mxu0 0.0
    %156 = vmatpush1.msra.mxu0 0.0
    %157 = vmatprep.subr.mxu0 0.0
    %158 = vmatpush1.msra.mxu0 0.0
    %159 = vmatprep.subr.mxu0 0.0
    %160 = vmatpush1.msra.mxu0 0.0
    %161 = vmatprep.subr.mxu0 0.0
    %162 = vmatpush1.msra.mxu0 0.0
    %163 = vmatprep.subr.mxu0 0.0
    %164 = vmatpush1.msra.mxu0 0.0
    %165 = vmatprep.subr.mxu0 0.0
    %166 = vmatpush1.msra.mxu0 0.0
    %167 = vmatprep.subr.mxu0 0.0
    %168 = vmatpush1.msra.mxu0 0.0
    %169 = vmatprep.subr.mxu0 0.0
    %170 = vmatpush1.msra.mxu0 0.0
    %171 = vmatprep.subr.mxu0 0.0
    %172 = vmatpush1.msra.mxu0 0.0
    %173 = vmatprep.subr.mxu0 0.0
    %174 = vmatpush1.msra.mxu0 0.0
    %175 = vmatprep.subr.mxu0 0.0
    %176 = vmatpush1.msra.mxu0 0.0
    %177 = vmatprep.subr.mxu0 0.0
    %178 = vmatpush1.msra.mxu0 0.0
    %179 = vmatprep.subr.mxu0 0.0
    %180 = vmatpush1.msra.mxu0 0.0
    %181 = vmatprep.subr.mxu0 0.0
    %182 = vmatpush1.msra.mxu0 0.0
    %183 = vmatprep.subr.mxu0 0.0
    %184 = vmatpush1.msra.mxu0 0.0
    %185 = vmatprep.subr.mxu0 0.0
    %186 = vmatpush1.msra.mxu0 0.0
    %187 = vmatprep.subr.mxu0 0.0
    %188 = vmatpush1.msra.mxu0 0.0
    %189 = vmatprep.subr.mxu0 0.0
    %190 = vmatpush1.msra.mxu0 0.0
    %191 = vmatprep.subr.mxu0 0.0
    %192 = vmatpush1.msra.mxu0 0.0
    %193 = vmatprep.mubr.f32.mxu0 0.0
    %194 = vmatmul.mubr.f32.gmra.mrb[0].mxu0 %v127
    %v195 = vpop.f32.mrb[0].mxu0
    %v196 = vadd.f32 %v124, %v195
    %v197 = vpop.f32.mrb[0].mxu0
    %198 = vdwg.mxu0
    %v199 = vmax.f32 %v196, 0.0
    %v200 = vld [vmem:[%s3] sm:$0xff]
    %v201 = vld [vmem:[%s3 + $0x8] sm:$0xff]
    %v202 = vld [vmem:[%s3 + $0x10] sm:$0xff]
    %v203 = vld [vmem:[%s3 + $0x18] sm:$0xff]
    %v204 = vld [vmem:[%s3 + $0x20] sm:$0xff]
    %v205 = vld [vmem:[%s3 + $0x28] sm:$0xff]
    %v206 = vld [vmem:[%s3 + $0x30] sm:$0xff]
    %v207 = vld [vmem:[%s3 + $0x38] sm:$0xff]
    %v208 = vlaneseq
    %v209 = vshrl.u32 %v208, 7
    %v210 = vsub.s32 0, %v209
    %v211 = vrot.slane %v27, %v210
    %v213 = vsel %vm125, %v199, 0
    %215 = vmatprep.subr.mxu0 0.0
    %216 = vmatpush1.msra.mxu0 %v200
    %217 = vmatprep.subr.mxu0 0.0
    %218 = vmatpush1.msra.mxu0 %v201
    %219 = vmatprep.subr.mxu0 0.0
    %220 = vmatpush1.msra.mxu0 %v202
    %221 = vmatprep.subr.mxu0 0.0
    %222 = vmatpush1.msra.mxu0 %v203
    %223 = vmatprep.subr.mxu0 0.0
    %224 = vmatpush1.msra.mxu0 %v204
    %225 = vmatprep.subr.mxu0 0.0
    %226 = vmatpush1.msra.mxu0 %v205
    %227 = vmatprep.subr.mxu0 0.0
    %228 = vmatpush1.msra.mxu0 %v206
    %229 = vmatprep.subr.mxu0 0.0
    %230 = vmatpush1.msra.mxu0 %v207
    %231 = vmatprep.subr.mxu0 0.0
    %232 = vmatpush1.msra.mxu0 0.0
    %233 = vmatprep.subr.mxu0 0.0
    %234 = vmatpush1.msra.mxu0 0.0
    %235 = vmatprep.subr.mxu0 0.0
    %236 = vmatpush1.msra.mxu0 0.0
    %237 = vmatprep.subr.mxu0 0.0
    %238 = vmatpush1.msra.mxu0 0.0
    %239 = vmatprep.subr.mxu0 0.0
    %240 = vmatpush1.msra.mxu0 0.0
    %241 = vmatprep.subr.mxu0 0.0
    %242 = vmatpush1.msra.mxu0 0.0
    %243 = vmatprep.subr.mxu0 0.0
    %244 = vmatpush1.msra.mxu0 0.0
    %245 = vmatprep.subr.mxu0 0.0
    %246 = vmatpush1.msra.mxu0 0.0
    %247 = vmatprep.subr.mxu0 0.0
    %248 = vmatpush1.msra.mxu0 0.0
    %249 = vmatprep.subr.mxu0 0.0
    %250 = vmatpush1.msra.mxu0 0.0
    %251 = vmatprep.subr.mxu0 0.0
    %252 = vmatpush1.msra.mxu0 0.0
    %253 = vmatprep.subr.mxu0 0.0
    %254 = vmatpush1.msra.mxu0 0.0
    %255 = vmatprep.subr.mxu0 0.0
    %256 = vmatpush1.msra.mxu0 0.0
    %257 = vmatprep.subr.mxu0 0.0
    %258 = vmatpush1.msra.mxu0 0.0
    %259 = vmatprep.subr.mxu0 0.0
    %260 = vmatpush1.msra.mxu0 0.0
    %261 = vmatprep.subr.mxu0 0.0
    %262 = vmatpush1.msra.mxu0 0.0
    %263 = vmatprep.subr.mxu0 0.0
    %264 = vmatpush1.msra.mxu0 0.0
    %265 = vmatprep.subr.mxu0 0.0
    %266 = vmatpush1.msra.mxu0 0.0
    %267 = vmatprep.subr.mxu0 0.0
    %268 = vmatpush1.msra.mxu0 0.0
    %269 = vmatprep.subr.mxu0 0.0
    %270 = vmatpush1.msra.mxu0 0.0
    %271 = vmatprep.subr.mxu0 0.0
    %272 = vmatpush1.msra.mxu0 0.0
    %273 = vmatprep.subr.mxu0 0.0
    %274 = vmatpush1.msra.mxu0 0.0
    %275 = vmatprep.subr.mxu0 0.0
    %276 = vmatpush1.msra.mxu0 0.0
    %277 = vmatprep.subr.mxu0 0.0
    %278 = vmatpush1.msra.mxu0 0.0
    %279 = vmatprep.mubr.f32.mxu0 0.0
    %280 = vmatmul.mubr.f32.gmra.mrb[0].mxu0 %v213
    %v281 = vpop.f32.mrb[0].mxu0
    %v282 = vadd.f32 %v211, %v281
    %v283 = vpop.f32.mrb[0].mxu0
    %284 = vdwg.mxu0
    %v285 = vmax.f32 %v282, 0.0
    %v286 = vld [vmem:[%s4] sm:$0xff]
    %v287 = vld [vmem:[%s4 + $0x8] sm:$0xff]
    %v288 = vld [vmem:[%s4 + $0x10] sm:$0xff]
    %v289 = vld [vmem:[%s4 + $0x18] sm:$0xff]
    %v290 = vld [vmem:[%s4 + $0x20] sm:$0xff]
    %v291 = vld [vmem:[%s4 + $0x28] sm:$0xff]
    %v292 = vld [vmem:[%s4 + $0x30] sm:$0xff]
    %v293 = vld [vmem:[%s4 + $0x38] sm:$0xff]
    %v294 = vld [vmem:[%s4 + $0x40] sm:$0xff]
    %v295 = vld [vmem:[%s4 + $0x48] sm:$0xff]
    %v296 = vld [vmem:[%s4 + $0x50] sm:$0xff]
    %v297 = vld [vmem:[%s4 + $0x58] sm:$0xff]
    %v298 = vld [vmem:[%s4 + $0x60] sm:$0xff]
    %v299 = vld [vmem:[%s4 + $0x68] sm:$0xff]
    %v300 = vld [vmem:[%s4 + $0x70] sm:$0xff]
    %v301 = vld [vmem:[%s4 + $0x78] sm:$0xff]
    %v302 = vlaneseq
    %v303 = vshrl.u32 %v302, 7
    %v304 = vsub.s32 0, %v303
    %v305 = vrot.slane %v28, %v304
    %306 = vmatprep.subr.mxu0 0.0
    %307 = vmatpush1.msra.mxu0 %v286
    %308 = vmatprep.subr.mxu0 0.0
    %309 = vmatpush1.msra.mxu0 %v287
    %310 = vmatprep.subr.mxu0 0.0
    %311 = vmatpush1.msra.mxu0 %v288
    %312 = vmatprep.subr.mxu0 0.0
    %313 = vmatpush1.msra.mxu0 %v289
    %314 = vmatprep.subr.mxu0 0.0
    %315 = vmatpush1.msra.mxu0 %v290
    %316 = vmatprep.subr.mxu0 0.0
    %317 = vmatpush1.msra.mxu0 %v291
    %318 = vmatprep.subr.mxu0 0.0
    %319 = vmatpush1.msra.mxu0 %v292
    %320 = vmatprep.subr.mxu0 0.0
    %321 = vmatpush1.msra.mxu0 %v293
    %322 = vmatprep.subr.mxu0 0.0
    %323 = vmatpush1.msra.mxu0 %v294
    %324 = vmatprep.subr.mxu0 0.0
    %325 = vmatpush1.msra.mxu0 %v295
    %326 = vmatprep.subr.mxu0 0.0
    %327 = vmatpush1.msra.mxu0 %v296
    %328 = vmatprep.subr.mxu0 0.0
    %329 = vmatpush1.msra.mxu0 %v297
    %330 = vmatprep.subr.mxu0 0.0
    %331 = vmatpush1.msra.mxu0 %v298
    %332 = vmatprep.subr.mxu0 0.0
    %333 = vmatpush1.msra.mxu0 %v299
    %334 = vmatprep.subr.mxu0 0.0
    %335 = vmatpush1.msra.mxu0 %v300
    %336 = vmatprep.subr.mxu0 0.0
    %337 = vmatpush1.msra.mxu0 %v301
    %338 = vmatprep.subr.mxu0 0.0
    %339 = vmatpush1.msra.mxu0 0.0
    %340 = vmatprep.subr.mxu0 0.0
    %341 = vmatpush1.msra.mxu0 0.0
    %342 = vmatprep.subr.mxu0 0.0
    %343 = vmatpush1.msra.mxu0 0.0
    %344 = vmatprep.subr.mxu0 0.0
    %345 = vmatpush1.msra.mxu0 0.0
    %346 = vmatprep.subr.mxu0 0.0
    %347 = vmatpush1.msra.mxu0 0.0
    %348 = vmatprep.subr.mxu0 0.0
    %349 = vmatpush1.msra.mxu0 0.0
    %350 = vmatprep.subr.mxu0 0.0
    %351 = vmatpush1.msra.mxu0 0.0
    %352 = vmatprep.subr.mxu0 0.0
    %353 = vmatpush1.msra.mxu0 0.0
    %354 = vmatprep.subr.mxu0 0.0
    %355 = vmatpush1.msra.mxu0 0.0
    %356 = vmatprep.subr.mxu0 0.0
    %357 = vmatpush1.msra.mxu0 0.0
    %358 = vmatprep.subr.mxu0 0.0
    %359 = vmatpush1.msra.mxu0 0.0
    %360 = vmatprep.subr.mxu0 0.0
    %361 = vmatpush1.msra.mxu0 0.0
    %362 = vmatprep.subr.mxu0 0.0
    %363 = vmatpush1.msra.mxu0 0.0
    %364 = vmatprep.subr.mxu0 0.0
    %365 = vmatpush1.msra.mxu0 0.0
    %366 = vmatprep.subr.mxu0 0.0
    %367 = vmatpush1.msra.mxu0 0.0
    %368 = vmatprep.subr.mxu0 0.0
    %369 = vmatpush1.msra.mxu0 0.0
    %370 = vmatprep.mubr.f32.mxu0 0.0
    %371 = vmatmul.mubr.f32.gmra.mrb[0].mxu0 %v285
    %v372 = vpop.f32.mrb[0].mxu0
    %v373 = vadd.f32 %v305, %v372
    %v374 = vpop.f32.mrb[0].mxu0
    %375 = vdwg.mxu0
    %vm376 = vcmask 64512
    %377 = vst.msk [vmem:[#allocation2] sm:$0xff] %vm376, %v373
    // Predicated region
    $region26: #{tpu_custom_call.1} parent=1 // pred_check
      _
    $region27: #{tpu_custom_call.1} parent=1 // pred_check_branch
      %379 = sbr.rel (0) target = $region29
    $region28: #{tpu_custom_call.1} parent=1 // pred_region
      %s381 = ssub.s32 128, 128
      %382 = vsyncadd [#allocation3], %s381
      %s384 = sshll.u32 [#allocation2], 4
      %s385 = int_to_ptr.vmem [resolvable:$true] %s384
      %387 = dma.vmem_to_hbm [thread:$0]  %s385, 128, %s6, [#allocation3]
    $region29: #{tpu_custom_call.1} parent=1 // pred_fallthru
      _
    // Predicated region
    $region30: #{tpu_custom_call.1} parent=1 // pred_check
      _
    $region31: #{tpu_custom_call.1} parent=1 // pred_check_branch
      %389 = sbr.rel (0) target = $region33
    $region32: #{tpu_custom_call.1} parent=1 // pred_region
      %390 = dma.done [#allocation3], 128
    $region33: #{tpu_custom_call.1} parent=1 // pred_fallthru
      _
    %391 = vsyncpa [#allocation3], 1

</llo_original>
